<compile_context>
chip_gen: v7x
topology: tpu7x:2x2x1
jax: 0.10.0
libtpu: 0.0.40
codegen_flags: <defaults>
</compile_context>

<pallas_src>
import jax
import jax.numpy as jnp
from jax.experimental import pallas as pl
from jax.experimental.pallas import tpu as pltpu


LAYER_DIMS = [(768, 32), (32, 16), (16, 8), (8, 8), (8, 1)]
OUT_PAD = 8   # fc5 zero-padded to 8 output columns (true output is column 0)


def mlp_kernel(x_ref,
               w1_ref, b1_ref,
               w2_ref, b2_ref,
               w3_ref, b3_ref,
               w4_ref, b4_ref,
               w5_ref, b5_ref,
               o_ref):
    # Cast x to bf16 in-register (a handful of VPU ops, fully hidden under the x DMA).
    x = x_ref[...].astype(jnp.bfloat16)                               # (TILE_B, 768)

    # Dominant layer: bf16 x @ bf16 w1 on the MXU, fp32 accumulation + bias + ReLU.
    h = jnp.dot(x, w1_ref[...], preferred_element_type=jnp.float32) + b1_ref[...]
    h = jnp.maximum(h, 0.0)

    # Tiny tail layers: bf16 activations/weights, fp32 accumulation + bias + ReLU.
    for w_ref, b_ref in ((w2_ref, b2_ref), (w3_ref, b3_ref), (w4_ref, b4_ref)):
        h = jnp.dot(h.astype(jnp.bfloat16), w_ref[...],
                    preferred_element_type=jnp.float32) + b_ref[...]
        h = jnp.maximum(h, 0.0)

    # Final layer (padded to OUT_PAD columns, no ReLU).
    h = jnp.dot(h.astype(jnp.bfloat16), w5_ref[...],
                preferred_element_type=jnp.float32) + b5_ref[...]
    o_ref[...] = h.astype(o_ref.dtype)


def _round_up(v, m):
    return (v + m - 1) // m * m


def _choose_tile_b(B, cap):
    """Tile rows: multiple of 16, <= cap, and >=2 tiles when there is enough work (v7x megacore)."""
    b16 = _round_up(B, 16)
    n_tiles = pl.cdiv(b16, cap)
    if b16 >= 1024:
        n_tiles = max(n_tiles, 2)
    return min(cap, _round_up(pl.cdiv(b16, n_tiles), 16))


def mlp_forward(x, params):
    """x: [B, 768] float32 (or bfloat16) -> [B, 1] float32."""
    B, D = x.shape
    assert D == LAYER_DIMS[0][0], D

    # fp32 x tiles capped at 4096 rows (double-buffered ~24 MiB, fits v7x's 64 MiB VMEM);
    # bf16 x can go to 8192 on any generation.
    cap = 8192 if x.dtype.itemsize <= 2 else 4096
    tile_b = _choose_tile_b(B, cap)
    num_tiles = pl.cdiv(B, tile_b)   # ragged last tile is masked by Pallas — no wrapper pad pass

    flat_args = [x]
    for i, (w, b) in enumerate(params):
        w = w.astype(jnp.bfloat16)           # tiny (<60 KiB total); in production store bf16 up front
        b = b.astype(jnp.float32)
        if i == len(params) - 1:
            w = jnp.pad(w, ((0, 0), (0, OUT_PAD - w.shape[1])))
            b = jnp.pad(b, ((0, 0), (0, OUT_PAD - b.shape[1])))
        flat_args.append(w)
        flat_args.append(b)

    const_map = lambda i: (0, 0)             # weights/biases stay resident across all grid steps
    in_specs = [pl.BlockSpec((tile_b, D), lambda i: (i, 0))]
    in_specs += [pl.BlockSpec(a.shape, const_map) for a in flat_args[1:]]
    out_spec = pl.BlockSpec((tile_b, OUT_PAD), lambda i: (i, 0))

    flops = 2 * B * (sum(m * n for m, n in LAYER_DIMS[:-1]) + 8 * OUT_PAD)
    bytes_accessed = (B * D * x.dtype.itemsize
                      + sum(int(a.size) * a.dtype.itemsize for a in flat_args[1:])
                      + B * OUT_PAD * 4)

    out = pl.pallas_call(
        mlp_kernel,
        out_shape=jax.ShapeDtypeStruct((B, OUT_PAD), jnp.float32),
        grid=(num_tiles,),
        in_specs=in_specs,
        out_specs=out_spec,
        compiler_params=pltpu.CompilerParams(
            dimension_semantics=("parallel",),
            vmem_limit_bytes=48 * 1024 * 1024,
        ),
        cost_estimate=pl.CostEstimate(
            flops=flops, transcendentals=0, bytes_accessed=bytes_accessed),
    )(*flat_args)

    return out[:, :1]


def init_params(key):
    """PyTorch nn.Linear default init: U(-1/sqrt(fan_in), 1/sqrt(fan_in)).
    Weights stored as [in_features, out_features]; bias as [1, out_features]."""
    params = []
    for (fan_in, fan_out) in LAYER_DIMS:
        key, kw, kb = jax.random.split(key, 3)
        bound = 1.0 / (fan_in ** 0.5)
        w = jax.random.uniform(kw, (fan_in, fan_out), jnp.float32,
                               minval=-bound, maxval=bound)
        b = jax.random.uniform(kb, (1, fan_out), jnp.float32,
                               minval=-bound, maxval=bound)
        params.append((w, b))
    return params


def reference_forward(x, params):
    """Pure-JAX reference mirroring the kernel's bf16-storage / fp32-accumulate math."""
    h = x.astype(jnp.bfloat16)
    for i, (w, b) in enumerate(params):
        h = (jnp.dot(h, w.astype(jnp.bfloat16), preferred_element_type=jnp.float32)
             + b.astype(jnp.float32))
        if i < len(params) - 1:
            h = jnp.maximum(h, 0.0).astype(jnp.bfloat16)
    return h


if __name__ == "__main__":
    key = jax.random.PRNGKey(0)
    key, kx = jax.random.split(key)

    B = 8
    x = jax.random.normal(kx, (B, 768), jnp.float32)
    params = init_params(key)

    out = jax.block_until_ready(mlp_forward(x, params))
    ref = reference_forward(x, params)
    assert out.shape == (B, 1), out.shape
    assert jnp.allclose(out, ref, atol=1e-2, rtol=1e-2), "mismatch vs reference"

    # Ragged batch (not a multiple of the 16-row tile granularity) — exercises masked last tile.
    B2 = 13
    x2 = jax.random.normal(jax.random.PRNGKey(7), (B2, 768), jnp.float32)
    out2 = jax.block_until_ready(mlp_forward(x2, params))
    ref2 = reference_forward(x2, params)
    assert out2.shape == (B2, 1), out2.shape
    assert jnp.allclose(out2, ref2, atol=1e-2, rtol=1e-2), "mismatch vs reference (ragged batch)"

    print("KERNEL_OK")
</pallas_src>

<mosaic_0001>
module attributes {stable_mosaic.version = 11 : i64} {
  func.func @mlp_kernel(%arg0: i32, %arg1: memref<16x768xf32, #tpu.memory_space<vmem>>, %arg2: memref<768x32xbf16, #tpu.memory_space<vmem>>, %arg3: memref<1x32xf32, #tpu.memory_space<vmem>>, %arg4: memref<32x16xbf16, #tpu.memory_space<vmem>>, %arg5: memref<1x16xf32, #tpu.memory_space<vmem>>, %arg6: memref<16x8xbf16, #tpu.memory_space<vmem>>, %arg7: memref<1x8xf32, #tpu.memory_space<vmem>>, %arg8: memref<8x8xbf16, #tpu.memory_space<vmem>>, %arg9: memref<1x8xf32, #tpu.memory_space<vmem>>, %arg10: memref<8x8xbf16, #tpu.memory_space<vmem>>, %arg11: memref<1x8xf32, #tpu.memory_space<vmem>>, %arg12: memref<16x8xf32, #tpu.memory_space<vmem>>) attributes {dimension_semantics = [#tpu.dimension_semantics<parallel>], iteration_bounds = array<i64: 1>, scalar_prefetch = 0 : i64, scratch_operands = 0 : i64, tpu.core_type = #tpu.core_type<tc>, window_params = [{transform_indices = @transform_0, window_bounds = array<i64: 16, 768>}, {pipeline_mode = #tpu.pipeline_mode<synchronous>, transform_indices = @transform_1, window_bounds = array<i64: 768, 32>}, {pipeline_mode = #tpu.pipeline_mode<synchronous>, transform_indices = @transform_2, window_bounds = array<i64: 1, 32>}, {pipeline_mode = #tpu.pipeline_mode<synchronous>, transform_indices = @transform_3, window_bounds = array<i64: 32, 16>}, {pipeline_mode = #tpu.pipeline_mode<synchronous>, transform_indices = @transform_4, window_bounds = array<i64: 1, 16>}, {pipeline_mode = #tpu.pipeline_mode<synchronous>, transform_indices = @transform_5, window_bounds = array<i64: 16, 8>}, {pipeline_mode = #tpu.pipeline_mode<synchronous>, transform_indices = @transform_6, window_bounds = array<i64: 1, 8>}, {pipeline_mode = #tpu.pipeline_mode<synchronous>, transform_indices = @transform_7, window_bounds = array<i64: 8, 8>}, {pipeline_mode = #tpu.pipeline_mode<synchronous>, transform_indices = @transform_8, window_bounds = array<i64: 1, 8>}, {pipeline_mode = #tpu.pipeline_mode<synchronous>, transform_indices = @transform_9, window_bounds = array<i64: 8, 8>}, {pipeline_mode = #tpu.pipeline_mode<synchronous>, transform_indices = @transform_10, window_bounds = array<i64: 1, 8>}, {transform_indices = @transform_11, window_bounds = array<i64: 16, 8>}]} {
    %c0 = arith.constant 0 : index
    %c0_0 = arith.constant 0 : index
    %0 = vector.load %arg1[%c0, %c0_0] : memref<16x768xf32, #tpu.memory_space<vmem>>, vector<16x768xf32>
    %1 = arith.truncf %0 : vector<16x768xf32> to vector<16x768xbf16>
    %c0_1 = arith.constant 0 : index
    %c0_2 = arith.constant 0 : index
    %2 = vector.load %arg2[%c0_1, %c0_2] : memref<768x32xbf16, #tpu.memory_space<vmem>>, vector<768x32xbf16>
    %cst = arith.constant dense<0.000000e+00> : vector<16x32xf32>
    %3 = tpu.matmul %1, %2, %cst {dimension_numbers = #tpu.dot_dimension_numbers<[1], [0], [0], [1], [0, 0, 1, 1], [], []>} : vector<16x768xbf16>, vector<768x32xbf16>, vector<16x32xf32> -> vector<16x32xf32>
    %c0_3 = arith.constant 0 : index
    %c0_4 = arith.constant 0 : index
    %4 = vector.load %arg3[%c0_3, %c0_4] : memref<1x32xf32, #tpu.memory_space<vmem>>, vector<1x32xf32>
    %5 = vector.broadcast %4 : vector<1x32xf32> to vector<16x32xf32>
    %6 = arith.addf %3, %5 : vector<16x32xf32>
    %cst_5 = arith.constant 0.000000e+00 : f32
    %7 = vector.broadcast %cst_5 : f32 to vector<16x32xf32>
    %8 = arith.maximumf %6, %7 : vector<16x32xf32>
    %9 = arith.truncf %8 : vector<16x32xf32> to vector<16x32xbf16>
    %c0_6 = arith.constant 0 : index
    %c0_7 = arith.constant 0 : index
    %10 = vector.load %arg4[%c0_6, %c0_7] : memref<32x16xbf16, #tpu.memory_space<vmem>>, vector<32x16xbf16>
    %cst_8 = arith.constant dense<0.000000e+00> : vector<16x16xf32>
    %11 = tpu.matmul %9, %10, %cst_8 {dimension_numbers = #tpu.dot_dimension_numbers<[1], [0], [0], [1], [0, 0, 1, 1], [], []>} : vector<16x32xbf16>, vector<32x16xbf16>, vector<16x16xf32> -> vector<16x16xf32>
    %c0_9 = arith.constant 0 : index
    %c0_10 = arith.constant 0 : index
    %12 = vector.load %arg5[%c0_9, %c0_10] : memref<1x16xf32, #tpu.memory_space<vmem>>, vector<1x16xf32>
    %13 = vector.broadcast %12 : vector<1x16xf32> to vector<16x16xf32>
    %14 = arith.addf %11, %13 : vector<16x16xf32>
    %cst_11 = arith.constant 0.000000e+00 : f32
    %15 = vector.broadcast %cst_11 : f32 to vector<16x16xf32>
    %16 = arith.maximumf %14, %15 : vector<16x16xf32>
    %17 = arith.truncf %16 : vector<16x16xf32> to vector<16x16xbf16>
    %c0_12 = arith.constant 0 : index
    %c0_13 = arith.constant 0 : index
    %18 = vector.load %arg6[%c0_12, %c0_13] : memref<16x8xbf16, #tpu.memory_space<vmem>>, vector<16x8xbf16>
    %cst_14 = arith.constant dense<0.000000e+00> : vector<16x8xf32>
    %19 = tpu.matmul %17, %18, %cst_14 {dimension_numbers = #tpu.dot_dimension_numbers<[1], [0], [0], [1], [0, 0, 1, 1], [], []>} : vector<16x16xbf16>, vector<16x8xbf16>, vector<16x8xf32> -> vector<16x8xf32>
    %c0_15 = arith.constant 0 : index
    %c0_16 = arith.constant 0 : index
    %20 = vector.load %arg7[%c0_15, %c0_16] : memref<1x8xf32, #tpu.memory_space<vmem>>, vector<1x8xf32>
    %21 = vector.broadcast %20 : vector<1x8xf32> to vector<16x8xf32>
    %22 = arith.addf %19, %21 : vector<16x8xf32>
    %cst_17 = arith.constant 0.000000e+00 : f32
    %23 = vector.broadcast %cst_17 : f32 to vector<16x8xf32>
    %24 = arith.maximumf %22, %23 : vector<16x8xf32>
    %25 = arith.truncf %24 : vector<16x8xf32> to vector<16x8xbf16>
    %c0_18 = arith.constant 0 : index
    %c0_19 = arith.constant 0 : index
    %26 = vector.load %arg8[%c0_18, %c0_19] : memref<8x8xbf16, #tpu.memory_space<vmem>>, vector<8x8xbf16>
    %cst_20 = arith.constant dense<0.000000e+00> : vector<16x8xf32>
    %27 = tpu.matmul %25, %26, %cst_20 {dimension_numbers = #tpu.dot_dimension_numbers<[1], [0], [0], [1], [0, 0, 1, 1], [], []>} : vector<16x8xbf16>, vector<8x8xbf16>, vector<16x8xf32> -> vector<16x8xf32>
    %c0_21 = arith.constant 0 : index
    %c0_22 = arith.constant 0 : index
    %28 = vector.load %arg9[%c0_21, %c0_22] : memref<1x8xf32, #tpu.memory_space<vmem>>, vector<1x8xf32>
    %29 = vector.broadcast %28 : vector<1x8xf32> to vector<16x8xf32>
    %30 = arith.addf %27, %29 : vector<16x8xf32>
    %cst_23 = arith.constant 0.000000e+00 : f32
    %31 = vector.broadcast %cst_23 : f32 to vector<16x8xf32>
    %32 = arith.maximumf %30, %31 : vector<16x8xf32>
    %33 = arith.truncf %32 : vector<16x8xf32> to vector<16x8xbf16>
    %c0_24 = arith.constant 0 : index
    %c0_25 = arith.constant 0 : index
    %34 = vector.load %arg10[%c0_24, %c0_25] : memref<8x8xbf16, #tpu.memory_space<vmem>>, vector<8x8xbf16>
    %cst_26 = arith.constant dense<0.000000e+00> : vector<16x8xf32>
    %35 = tpu.matmul %33, %34, %cst_26 {dimension_numbers = #tpu.dot_dimension_numbers<[1], [0], [0], [1], [0, 0, 1, 1], [], []>} : vector<16x8xbf16>, vector<8x8xbf16>, vector<16x8xf32> -> vector<16x8xf32>
    %c0_27 = arith.constant 0 : index
    %c0_28 = arith.constant 0 : index
    %36 = vector.load %arg11[%c0_27, %c0_28] : memref<1x8xf32, #tpu.memory_space<vmem>>, vector<1x8xf32>
    %37 = vector.broadcast %36 : vector<1x8xf32> to vector<16x8xf32>
    %38 = arith.addf %35, %37 : vector<16x8xf32>
    %c0_29 = arith.constant 0 : index
    %c0_30 = arith.constant 0 : index
    %39 = vector.load %arg12[%c0_29, %c0_30] : memref<16x8xf32, #tpu.memory_space<vmem>>, vector<16x8xf32>
    tpu.vector_store %arg12[%c0_29, %c0_30], %38 {strides = array<i32>} : memref<16x8xf32, #tpu.memory_space<vmem>>, vector<16x8xf32>,
    return
  }
  func.func @transform_0(%arg0: i32) -> (i32, i32) {
    %c0_i32 = arith.constant 0 : i32
    %c0_i32_0 = arith.constant 0 : i32
    return %arg0, %c0_i32 : i32, i32
  }
  func.func @transform_1(%arg0: i32) -> (i32, i32) {
    %c0_i32 = arith.constant 0 : i32
    %c0_i32_0 = arith.constant 0 : i32
    %c0_i32_1 = arith.constant 0 : i32
    return %c0_i32, %c0_i32_0 : i32, i32
  }
  func.func @transform_2(%arg0: i32) -> (i32, i32) {
    %c0_i32 = arith.constant 0 : i32
    %c0_i32_0 = arith.constant 0 : i32
    %c0_i32_1 = arith.constant 0 : i32
    return %c0_i32, %c0_i32_0 : i32, i32
  }
  func.func @transform_3(%arg0: i32) -> (i32, i32) {
    %c0_i32 = arith.constant 0 : i32
    %c0_i32_0 = arith.constant 0 : i32
    %c0_i32_1 = arith.constant 0 : i32
    return %c0_i32, %c0_i32_0 : i32, i32
  }
  func.func @transform_4(%arg0: i32) -> (i32, i32) {
    %c0_i32 = arith.constant 0 : i32
    %c0_i32_0 = arith.constant 0 : i32
    %c0_i32_1 = arith.constant 0 : i32
    return %c0_i32, %c0_i32_0 : i32, i32
  }
  func.func @transform_5(%arg0: i32) -> (i32, i32) {
    %c0_i32 = arith.constant 0 : i32
    %c0_i32_0 = arith.constant 0 : i32
    %c0_i32_1 = arith.constant 0 : i32
    return %c0_i32, %c0_i32_0 : i32, i32
  }
  func.func @transform_6(%arg0: i32) -> (i32, i32) {
    %c0_i32 = arith.constant 0 : i32
    %c0_i32_0 = arith.constant 0 : i32
    %c0_i32_1 = arith.constant 0 : i32
    return %c0_i32, %c0_i32_0 : i32, i32
  }
  func.func @transform_7(%arg0: i32) -> (i32, i32) {
    %c0_i32 = arith.constant 0 : i32
    %c0_i32_0 = arith.constant 0 : i32
    %c0_i32_1 = arith.constant 0 : i32
    return %c0_i32, %c0_i32_0 : i32, i32
  }
  func.func @transform_8(%arg0: i32) -> (i32, i32) {
    %c0_i32 = arith.constant 0 : i32
    %c0_i32_0 = arith.constant 0 : i32
    %c0_i32_1 = arith.constant 0 : i32
    return %c0_i32, %c0_i32_0 : i32, i32
  }
  func.func @transform_9(%arg0: i32) -> (i32, i32) {
    %c0_i32 = arith.constant 0 : i32
    %c0_i32_0 = arith.constant 0 : i32
    %c0_i32_1 = arith.constant 0 : i32
    return %c0_i32, %c0_i32_0 : i32, i32
  }
  func.func @transform_10(%arg0: i32) -> (i32, i32) {
    %c0_i32 = arith.constant 0 : i32
    %c0_i32_0 = arith.constant 0 : i32
    %c0_i32_1 = arith.constant 0 : i32
    return %c0_i32, %c0_i32_0 : i32, i32
  }
  func.func @transform_11(%arg0: i32) -> (i32, i32) {
    %c0_i32 = arith.constant 0 : i32
    %c0_i32_0 = arith.constant 0 : i32
    return %arg0, %c0_i32 : i32, i32
  }
}

</mosaic_0001>

<llo_original>
// kernel: tpu_custom_call.1
$region0: #{tpu_custom_call.1}
  #allocation0 [shape = 'u32[]', space=smem, size = 0x4, offset = 0x4, fixed_abs, tag = 'smem constant byte address 0x4 - core index']
  #allocation1 [shape = 'u32[144,128]{1,0:T(1,128)}', space=vmem, size = 0x12000, scoped, tag = 'internal scratch']
  %s0 = inlined_call_operand.vmem [shape: f32[8,768], index: 0, kind: input, shape index: {}]
  %s1 = inlined_call_operand.vmem [shape: bf16[768,32], index: 1, kind: input, shape index: {}]
  %s2 = inlined_call_operand.vmem [shape: f32[1,32], index: 2, kind: input, shape index: {}]
  %s3 = inlined_call_operand.vmem [shape: bf16[32,16], index: 3, kind: input, shape index: {}]
  %s4 = inlined_call_operand.vmem [shape: f32[1,16], index: 4, kind: input, shape index: {}]
  %s5 = inlined_call_operand.vmem [shape: bf16[16,8], index: 5, kind: input, shape index: {}]
  %s6 = inlined_call_operand.vmem [shape: f32[1,8], index: 6, kind: input, shape index: {}]
  %s7 = inlined_call_operand.vmem [shape: bf16[8,8], index: 7, kind: input, shape index: {}]
  %s8 = inlined_call_operand.vmem [shape: f32[1,8], index: 8, kind: input, shape index: {}]
  %s9 = inlined_call_operand.vmem [shape: bf16[8,8], index: 9, kind: input, shape index: {}]
  %s10 = inlined_call_operand.vmem [shape: f32[1,8], index: 10, kind: input, shape index: {}]
  %s11 = inlined_call_operand.hbm [shape: f32[8,8], index: 11, kind: output, shape index: {}]
  %s12 = sld [smem:[#allocation0]]
  $region54: #{tpu_custom_call.1} parent=0
    _
  %s14 = ssub.s32 1, %s12
  %s15 = scalar_select 0, %s14, %s12
  $region1: #{tpu_custom_call.1} parent=0
    #allocation2 [shape = 'u8[8192]{0}', space=vmem, size = 0x2000, scoped, tag = 'output window, operand 0, single buffered']
    #allocation3 [shape = 's32[1]{0}', space=sflag, size = 0x4, scoped, tag = 'scoped memory for tpu_custom_call.1']
    %16 = vsyncpa [#allocation3], 0
    // Predicated region
    $region2: #{tpu_custom_call.1} parent=1 // pred_check
      _
    $region3: #{tpu_custom_call.1} parent=1 // pred_check_branch
      %18 = sbr.rel (0) target = $region5
    $region4: #{tpu_custom_call.1} parent=1 // pred_region
      _
    $region5: #{tpu_custom_call.1} parent=1 // pred_fallthru
      _
    // Predicated region
    $region6: #{tpu_custom_call.1} parent=1 // pred_check
      _
    $region7: #{tpu_custom_call.1} parent=1 // pred_check_branch
      %20 = sbr.rel (0) target = $region9
    $region8: #{tpu_custom_call.1} parent=1 // pred_region
      _
    $region9: #{tpu_custom_call.1} parent=1 // pred_fallthru
      _
    // Predicated region
    $region10: #{tpu_custom_call.1} parent=1 // pred_check
      _
    $region11: #{tpu_custom_call.1} parent=1 // pred_check_branch
      %22 = sbr.rel (0) target = $region13
    $region12: #{tpu_custom_call.1} parent=1 // pred_region
      _
    $region13: #{tpu_custom_call.1} parent=1 // pred_fallthru
      _
    // Predicated region
    $region14: #{tpu_custom_call.1} parent=1 // pred_check
      _
    $region15: #{tpu_custom_call.1} parent=1 // pred_check_branch
      %24 = sbr.rel (0) target = $region17
    $region16: #{tpu_custom_call.1} parent=1 // pred_region
      _
    $region17: #{tpu_custom_call.1} parent=1 // pred_fallthru
      _
    // Predicated region
    $region18: #{tpu_custom_call.1} parent=1 // pred_check
      _
    $region19: #{tpu_custom_call.1} parent=1 // pred_check_branch
      %26 = sbr.rel (0) target = $region21
    $region20: #{tpu_custom_call.1} parent=1 // pred_region
      _
    $region21: #{tpu_custom_call.1} parent=1 // pred_fallthru
      _
    // Predicated region
    $region22: #{tpu_custom_call.1} parent=1 // pred_check
      _
    $region23: #{tpu_custom_call.1} parent=1 // pred_check_branch
      %28 = sbr.rel (0) target = $region25
    $region24: #{tpu_custom_call.1} parent=1 // pred_region
      _
    $region25: #{tpu_custom_call.1} parent=1 // pred_fallthru
      _
    // Predicated region
    $region26: #{tpu_custom_call.1} parent=1 // pred_check
      _
    $region27: #{tpu_custom_call.1} parent=1 // pred_check_branch
      %30 = sbr.rel (0) target = $region29
    $region28: #{tpu_custom_call.1} parent=1 // pred_region
      _
    $region29: #{tpu_custom_call.1} parent=1 // pred_fallthru
      _
    // Predicated region
    $region30: #{tpu_custom_call.1} parent=1 // pred_check
      _
    $region31: #{tpu_custom_call.1} parent=1 // pred_check_branch
      %32 = sbr.rel (0) target = $region33
    $region32: #{tpu_custom_call.1} parent=1 // pred_region
      _
    $region33: #{tpu_custom_call.1} parent=1 // pred_fallthru
      _
    // Predicated region
    $region34: #{tpu_custom_call.1} parent=1 // pred_check
      _
    $region35: #{tpu_custom_call.1} parent=1 // pred_check_branch
      %34 = sbr.rel (0) target = $region37
    $region36: #{tpu_custom_call.1} parent=1 // pred_region
      _
    $region37: #{tpu_custom_call.1} parent=1 // pred_fallthru
      _
    // Predicated region
    $region38: #{tpu_custom_call.1} parent=1 // pred_check
      _
    $region39: #{tpu_custom_call.1} parent=1 // pred_check_branch
      %36 = sbr.rel (0) target = $region41
    $region40: #{tpu_custom_call.1} parent=1 // pred_region
      _
    $region41: #{tpu_custom_call.1} parent=1 // pred_fallthru
      _
    // Predicated region
    $region42: #{tpu_custom_call.1} parent=1 // pred_check
      _
    $region43: #{tpu_custom_call.1} parent=1 // pred_check_branch
      %38 = sbr.rel (0) target = $region45
    $region44: #{tpu_custom_call.1} parent=1 // pred_region
      _
    $region45: #{tpu_custom_call.1} parent=1 // pred_fallthru
      _
    %v40 = vld [vmem:[%s0] sm:$0xff]
    %v41 = vld [vmem:[%s0 + $0x8] sm:$0xff]
    %v42 = vld [vmem:[%s0 + $0x10] sm:$0xff]
    %v43 = vld [vmem:[%s0 + $0x18] sm:$0xff]
    %v44 = vld [vmem:[%s0 + $0x20] sm:$0xff]
    %v45 = vld [vmem:[%s0 + $0x28] sm:$0xff]
    %v46 = vld [vmem:[%s0 + $0x30] sm:$0xff]
    %v47 = vld [vmem:[%s0 + $0x38] sm:$0xff]
    %v48 = vld [vmem:[%s0 + $0x40] sm:$0xff]
    %v49 = vld [vmem:[%s0 + $0x48] sm:$0xff]
    %v50 = vld [vmem:[%s0 + $0x50] sm:$0xff]
    %v51 = vld [vmem:[%s0 + $0x58] sm:$0xff]
    %v52 = vpack.c.bf16 %v46, %v40
    %v53 = vpack.c.bf16 %v47, %v41
    %v54 = vpack.c.bf16 %v48, %v42
    %v55 = vpack.c.bf16 %v49, %v43
    %v56 = vpack.c.bf16 %v50, %v44
    %v57 = vpack.c.bf16 %v51, %v45
    %v58 = vld [vmem:[%s1] sm:$0xf]
    %v59 = vld [vmem:[%s1 + $0x4] sm:$0xf]
    %v60 = vld [vmem:[%s1 + $0x8] sm:$0xf]
    %v61 = vld [vmem:[%s1 + $0xc] sm:$0xf]
    %v62 = vld [vmem:[%s1 + $0x10] sm:$0xf]
    %v63 = vld [vmem:[%s1 + $0x14] sm:$0xf]
    %v64 = vld [vmem:[%s1 + $0x18] sm:$0xf]
    %v65 = vld [vmem:[%s1 + $0x1c] sm:$0xf]
    %v66 = vld [vmem:[%s1 + $0x20] sm:$0xf]
    %v67 = vld [vmem:[%s1 + $0x24] sm:$0xf]
    %v68 = vld [vmem:[%s1 + $0x28] sm:$0xf]
    %v69 = vld [vmem:[%s1 + $0x2c] sm:$0xf]
    %v70 = vld [vmem:[%s1 + $0x30] sm:$0xf]
    %v71 = vld [vmem:[%s1 + $0x34] sm:$0xf]
    %v72 = vld [vmem:[%s1 + $0x38] sm:$0xf]
    %v73 = vld [vmem:[%s1 + $0x3c] sm:$0xf]
    %v74 = vld [vmem:[%s1 + $0x40] sm:$0xf]
    %v75 = vld [vmem:[%s1 + $0x44] sm:$0xf]
    %v76 = vld [vmem:[%s1 + $0x48] sm:$0xf]
    %v77 = vld [vmem:[%s1 + $0x4c] sm:$0xf]
    %v78 = vld [vmem:[%s1 + $0x50] sm:$0xf]
    %v79 = vld [vmem:[%s1 + $0x54] sm:$0xf]
    %v80 = vld [vmem:[%s1 + $0x58] sm:$0xf]
    %v81 = vld [vmem:[%s1 + $0x5c] sm:$0xf]
    %v82 = vld [vmem:[%s1 + $0x60] sm:$0xf]
    %v83 = vld [vmem:[%s1 + $0x64] sm:$0xf]
    %v84 = vld [vmem:[%s1 + $0x68] sm:$0xf]
    %v85 = vld [vmem:[%s1 + $0x6c] sm:$0xf]
    %v86 = vld [vmem:[%s1 + $0x70] sm:$0xf]
    %v87 = vld [vmem:[%s1 + $0x74] sm:$0xf]
    %v88 = vld [vmem:[%s1 + $0x78] sm:$0xf]
    %v89 = vld [vmem:[%s1 + $0x7c] sm:$0xf]
    %v90 = vld [vmem:[%s1 + $0x80] sm:$0xf]
    %v91 = vld [vmem:[%s1 + $0x84] sm:$0xf]
    %v92 = vld [vmem:[%s1 + $0x88] sm:$0xf]
    %v93 = vld [vmem:[%s1 + $0x8c] sm:$0xf]
    %v94 = vld [vmem:[%s1 + $0x90] sm:$0xf]
    %v95 = vld [vmem:[%s1 + $0x94] sm:$0xf]
    %v96 = vld [vmem:[%s1 + $0x98] sm:$0xf]
    %v97 = vld [vmem:[%s1 + $0x9c] sm:$0xf]
    %v98 = vld [vmem:[%s1 + $0xa0] sm:$0xf]
    %v99 = vld [vmem:[%s1 + $0xa4] sm:$0xf]
    %v100 = vld [vmem:[%s1 + $0xa8] sm:$0xf]
    %v101 = vld [vmem:[%s1 + $0xac] sm:$0xf]
    %v102 = vld [vmem:[%s1 + $0xb0] sm:$0xf]
    %v103 = vld [vmem:[%s1 + $0xb4] sm:$0xf]
    %v104 = vld [vmem:[%s1 + $0xb8] sm:$0xf]
    %v105 = vld [vmem:[%s1 + $0xbc] sm:$0xf]
    %v106 = vld [vmem:[%s1 + $0xc0] sm:$0xf]
    %v107 = vld [vmem:[%s1 + $0xc4] sm:$0xf]
    %v108 = vld [vmem:[%s1 + $0xc8] sm:$0xf]
    %v109 = vld [vmem:[%s1 + $0xcc] sm:$0xf]
    %v110 = vld [vmem:[%s1 + $0xd0] sm:$0xf]
    %v111 = vld [vmem:[%s1 + $0xd4] sm:$0xf]
    %v112 = vld [vmem:[%s1 + $0xd8] sm:$0xf]
    %v113 = vld [vmem:[%s1 + $0xdc] sm:$0xf]
    %v114 = vld [vmem:[%s1 + $0xe0] sm:$0xf]
    %v115 = vld [vmem:[%s1 + $0xe4] sm:$0xf]
    %v116 = vld [vmem:[%s1 + $0xe8] sm:$0xf]
    %v117 = vld [vmem:[%s1 + $0xec] sm:$0xf]
    %v118 = vld [vmem:[%s1 + $0xf0] sm:$0xf]
    %v119 = vld [vmem:[%s1 + $0xf4] sm:$0xf]
    %v120 = vld [vmem:[%s1 + $0xf8] sm:$0xf]
    %v121 = vld [vmem:[%s1 + $0xfc] sm:$0xf]
    %v122 = vld [vmem:[%s1 + $0x100] sm:$0xf]
    %v123 = vld [vmem:[%s1 + $0x104] sm:$0xf]
    %v124 = vld [vmem:[%s1 + $0x108] sm:$0xf]
    %v125 = vld [vmem:[%s1 + $0x10c] sm:$0xf]
    %v126 = vld [vmem:[%s1 + $0x110] sm:$0xf]
    %v127 = vld [vmem:[%s1 + $0x114] sm:$0xf]
    %v128 = vld [vmem:[%s1 + $0x118] sm:$0xf]
    %v129 = vld [vmem:[%s1 + $0x11c] sm:$0xf]
    %v130 = vld [vmem:[%s1 + $0x120] sm:$0xf]
    %v131 = vld [vmem:[%s1 + $0x124] sm:$0xf]
    %v132 = vld [vmem:[%s1 + $0x128] sm:$0xf]
    %v133 = vld [vmem:[%s1 + $0x12c] sm:$0xf]
    %v134 = vld [vmem:[%s1 + $0x130] sm:$0xf]
    %v135 = vld [vmem:[%s1 + $0x134] sm:$0xf]
    %v136 = vld [vmem:[%s1 + $0x138] sm:$0xf]
    %v137 = vld [vmem:[%s1 + $0x13c] sm:$0xf]
    %v138 = vld [vmem:[%s1 + $0x140] sm:$0xf]
    %v139 = vld [vmem:[%s1 + $0x144] sm:$0xf]
    %v140 = vld [vmem:[%s1 + $0x148] sm:$0xf]
    %v141 = vld [vmem:[%s1 + $0x14c] sm:$0xf]
    %v142 = vld [vmem:[%s1 + $0x150] sm:$0xf]
    %v143 = vld [vmem:[%s1 + $0x154] sm:$0xf]
    %v144 = vld [vmem:[%s1 + $0x158] sm:$0xf]
    %v145 = vld [vmem:[%s1 + $0x15c] sm:$0xf]
    %v146 = vld [vmem:[%s1 + $0x160] sm:$0xf]
    %v147 = vld [vmem:[%s1 + $0x164] sm:$0xf]
    %v148 = vld [vmem:[%s1 + $0x168] sm:$0xf]
    %v149 = vld [vmem:[%s1 + $0x16c] sm:$0xf]
    %v150 = vld [vmem:[%s1 + $0x170] sm:$0xf]
    %v151 = vld [vmem:[%s1 + $0x174] sm:$0xf]
    %v152 = vld [vmem:[%s1 + $0x178] sm:$0xf]
    %v153 = vld [vmem:[%s1 + $0x17c] sm:$0xf]
    %v154 = vld [vmem:[%s2] sm:$0x1]
    %v156 = vlaneseq
    %v157 = vshrl.u32 %v156, 7
    %v158 = vsub.s32 0, %v157
    %v159 = vrot.slane %v154, %v158
    %v257 = vunpack.c.l.b16 %v58
    %v258 = vunpack.c.l.b16 %v59
    %v259 = vunpack.c.l.b16 %v60
    %v260 = vunpack.c.l.b16 %v61
    %v261 = vunpack.c.l.b16 %v62
    %v262 = vunpack.c.l.b16 %v63
    %v263 = vunpack.c.l.b16 %v64
    %v264 = vunpack.c.l.b16 %v65
    %v265 = vunpack.c.l.b16 %v66
    %v266 = vunpack.c.l.b16 %v67
    %v267 = vunpack.c.l.b16 %v68
    %v268 = vunpack.c.l.b16 %v69
    %v269 = vunpack.c.l.b16 %v70
    %v270 = vunpack.c.l.b16 %v71
    %v271 = vunpack.c.l.b16 %v72
    %v272 = vunpack.c.l.b16 %v73
    %v273 = vunpack.c.l.b16 %v74
    %v274 = vunpack.c.l.b16 %v75
    %v275 = vunpack.c.l.b16 %v76
    %v276 = vunpack.c.l.b16 %v77
    %v277 = vunpack.c.l.b16 %v78
    %v278 = vunpack.c.l.b16 %v79
    %v279 = vunpack.c.l.b16 %v80
    %v280 = vunpack.c.l.b16 %v81
    %v281 = vunpack.c.l.b16 %v82
    %v282 = vunpack.c.l.b16 %v83
    %v283 = vunpack.c.l.b16 %v84
    %v284 = vunpack.c.l.b16 %v85
    %v285 = vunpack.c.l.b16 %v86
    %v286 = vunpack.c.l.b16 %v87
    %v287 = vunpack.c.l.b16 %v88
    %v288 = vunpack.c.l.b16 %v89
    %v289 = vunpack.c.l.b16 %v90
    %v290 = vunpack.c.l.b16 %v91
    %v291 = vunpack.c.l.b16 %v92
    %v292 = vunpack.c.l.b16 %v93
    %v293 = vunpack.c.l.b16 %v94
    %v294 = vunpack.c.l.b16 %v95
    %v295 = vunpack.c.l.b16 %v96
    %v296 = vunpack.c.l.b16 %v97
    %v297 = vunpack.c.l.b16 %v98
    %v298 = vunpack.c.l.b16 %v99
    %v299 = vunpack.c.l.b16 %v100
    %v300 = vunpack.c.l.b16 %v101
    %v301 = vunpack.c.l.b16 %v102
    %v302 = vunpack.c.l.b16 %v103
    %v303 = vunpack.c.l.b16 %v104
    %v304 = vunpack.c.l.b16 %v105
    %v305 = vunpack.c.l.b16 %v106
    %v306 = vunpack.c.l.b16 %v107
    %v307 = vunpack.c.l.b16 %v108
    %v308 = vunpack.c.l.b16 %v109
    %v309 = vunpack.c.l.b16 %v110
    %v310 = vunpack.c.l.b16 %v111
    %v311 = vunpack.c.l.b16 %v112
    %v312 = vunpack.c.l.b16 %v113
    %v313 = vunpack.c.l.b16 %v114
    %v314 = vunpack.c.l.b16 %v115
    %v315 = vunpack.c.l.b16 %v116
    %v316 = vunpack.c.l.b16 %v117
    %v317 = vunpack.c.l.b16 %v118
    %v318 = vunpack.c.l.b16 %v119
    %v319 = vunpack.c.l.b16 %v120
    %v320 = vunpack.c.l.b16 %v121
    %v321 = vunpack.c.l.b16 %v122
    %v322 = vunpack.c.l.b16 %v123
    %v323 = vunpack.c.l.b16 %v124
    %v324 = vunpack.c.l.b16 %v125
    %v325 = vunpack.c.l.b16 %v126
    %v326 = vunpack.c.l.b16 %v127
    %v327 = vunpack.c.l.b16 %v128
    %v328 = vunpack.c.l.b16 %v129
    %v329 = vunpack.c.l.b16 %v130
    %v330 = vunpack.c.l.b16 %v131
    %v331 = vunpack.c.l.b16 %v132
    %v332 = vunpack.c.l.b16 %v133
    %v333 = vunpack.c.l.b16 %v134
    %v334 = vunpack.c.l.b16 %v135
    %v335 = vunpack.c.l.b16 %v136
    %v336 = vunpack.c.l.b16 %v137
    %v337 = vunpack.c.l.b16 %v138
    %v338 = vunpack.c.l.b16 %v139
    %v339 = vunpack.c.l.b16 %v140
    %v340 = vunpack.c.l.b16 %v141
    %v341 = vunpack.c.l.b16 %v142
    %v342 = vunpack.c.l.b16 %v143
    %v343 = vunpack.c.l.b16 %v144
    %v344 = vunpack.c.l.b16 %v145
    %v345 = vunpack.c.l.b16 %v146
    %v346 = vunpack.c.l.b16 %v147
    %v347 = vunpack.c.l.b16 %v148
    %v348 = vunpack.c.l.b16 %v149
    %v349 = vunpack.c.l.b16 %v150
    %v350 = vunpack.c.l.b16 %v151
    %v351 = vunpack.c.l.b16 %v152
    %v352 = vunpack.c.l.b16 %v153
    %v353 = vpack.c.b16 %v258, %v257
    %v354 = vpack.c.b16 %v260, %v259
    %v355 = vpack.c.b16 %v262, %v261
    %v356 = vpack.c.b16 %v264, %v263
    %v357 = vpack.c.b16 %v266, %v265
    %v358 = vpack.c.b16 %v268, %v267
    %v359 = vpack.c.b16 %v270, %v269
    %v360 = vpack.c.b16 %v272, %v271
    %v361 = vpack.c.b16 %v274, %v273
    %v362 = vpack.c.b16 %v276, %v275
    %v363 = vpack.c.b16 %v278, %v277
    %v364 = vpack.c.b16 %v280, %v279
    %v365 = vpack.c.b16 %v282, %v281
    %v366 = vpack.c.b16 %v284, %v283
    %v367 = vpack.c.b16 %v286, %v285
    %v368 = vpack.c.b16 %v288, %v287
    %v369 = vpack.c.b16 %v290, %v289
    %v370 = vpack.c.b16 %v292, %v291
    %v371 = vpack.c.b16 %v294, %v293
    %v372 = vpack.c.b16 %v296, %v295
    %v373 = vpack.c.b16 %v298, %v297
    %v374 = vpack.c.b16 %v300, %v299
    %v375 = vpack.c.b16 %v302, %v301
    %v376 = vpack.c.b16 %v304, %v303
    %v377 = vpack.c.b16 %v306, %v305
    %v378 = vpack.c.b16 %v308, %v307
    %v379 = vpack.c.b16 %v310, %v309
    %v380 = vpack.c.b16 %v312, %v311
    %v381 = vpack.c.b16 %v314, %v313
    %v382 = vpack.c.b16 %v316, %v315
    %v383 = vpack.c.b16 %v318, %v317
    %v384 = vpack.c.b16 %v320, %v319
    %v385 = vpack.c.b16 %v322, %v321
    %v386 = vpack.c.b16 %v324, %v323
    %v387 = vpack.c.b16 %v326, %v325
    %v388 = vpack.c.b16 %v328, %v327
    %v389 = vpack.c.b16 %v330, %v329
    %v390 = vpack.c.b16 %v332, %v331
    %v391 = vpack.c.b16 %v334, %v333
    %v392 = vpack.c.b16 %v336, %v335
    %v393 = vpack.c.b16 %v338, %v337
    %v394 = vpack.c.b16 %v340, %v339
    %v395 = vpack.c.b16 %v342, %v341
    %v396 = vpack.c.b16 %v344, %v343
    %v397 = vpack.c.b16 %v346, %v345
    %v398 = vpack.c.b16 %v348, %v347
    %v399 = vpack.c.b16 %v350, %v349
    %v400 = vpack.c.b16 %v352, %v351
    %449 = vmatprep.subr.bf16.mxu0 0
    %450 = vmatpush1.bf16.msra.mxu0 %v353
    %451 = vmatprep.subr.bf16.mxu0 0
    %452 = vmatpush1.bf16.msra.mxu0 %v354
    %453 = vmatprep.subr.bf16.mxu0 0
    %454 = vmatpush1.bf16.msra.mxu0 %v355
    %455 = vmatprep.subr.bf16.mxu0 0
    %456 = vmatpush1.bf16.msra.mxu0 %v356
    %457 = vmatprep.subr.bf16.mxu0 0
    %458 = vmatpush1.bf16.msra.mxu0 %v357
    %459 = vmatprep.subr.bf16.mxu0 0
    %460 = vmatpush1.bf16.msra.mxu0 %v358
    %461 = vmatprep.subr.bf16.mxu0 0
    %462 = vmatpush1.bf16.msra.mxu0 %v359
    %463 = vmatprep.subr.bf16.mxu0 0
    %464 = vmatpush1.bf16.msra.mxu0 %v360
    %465 = vmatprep.subr.bf16.mxu0 0
    %466 = vmatpush1.bf16.msra.mxu0 %v361
    %467 = vmatprep.subr.bf16.mxu0 0
    %468 = vmatpush1.bf16.msra.mxu0 %v362
    %469 = vmatprep.subr.bf16.mxu0 0
    %470 = vmatpush1.bf16.msra.mxu0 %v363
    %471 = vmatprep.subr.bf16.mxu0 0
    %472 = vmatpush1.bf16.msra.mxu0 %v364
    %473 = vmatprep.subr.bf16.mxu0 0
    %474 = vmatpush1.bf16.msra.mxu0 %v365
    %475 = vmatprep.subr.bf16.mxu0 0
    %476 = vmatpush1.bf16.msra.mxu0 %v366
    %477 = vmatprep.subr.bf16.mxu0 0
    %478 = vmatpush1.bf16.msra.mxu0 %v367
    %479 = vmatprep.subr.bf16.mxu0 0
    %480 = vmatpush1.bf16.msra.mxu0 %v368
    %481 = vmatprep.mubr.bf16.mxu0 %v53
    %482 = vmatmul.mubr.bf16.gmra.mrb[0].mxu0 %v52
    %v483 = vpop.f32.mrb[0].mxu0
    %v484 = vadd.f32 %v159, %v483
    %v485 = vpop.f32.mrb[0].mxu0
    %v486 = vpop.f32.mrb[0].mxu0
    %v487 = vadd.f32 %v159, %v486
    %v488 = vpop.f32.mrb[0].mxu0
    %489 = vdwg.mxu0
    %490 = vmatprep.subr.bf16.mxu0 0
    %491 = vmatpush1.bf16.msra.mxu0 %v369
    %492 = vmatprep.subr.bf16.mxu0 0
    %493 = vmatpush1.bf16.msra.mxu0 %v370
    %494 = vmatprep.subr.bf16.mxu0 0
    %495 = vmatpush1.bf16.msra.mxu0 %v371
    %496 = vmatprep.subr.bf16.mxu0 0
    %497 = vmatpush1.bf16.msra.mxu0 %v372
    %498 = vmatprep.subr.bf16.mxu0 0
    %499 = vmatpush1.bf16.msra.mxu0 %v373
    %500 = vmatprep.subr.bf16.mxu0 0
    %501 = vmatpush1.bf16.msra.mxu0 %v374
    %502 = vmatprep.subr.bf16.mxu0 0
    %503 = vmatpush1.bf16.msra.mxu0 %v375
    %504 = vmatprep.subr.bf16.mxu0 0
    %505 = vmatpush1.bf16.msra.mxu0 %v376
    %506 = vmatprep.subr.bf16.mxu0 0
    %507 = vmatpush1.bf16.msra.mxu0 %v377
    %508 = vmatprep.subr.bf16.mxu0 0
    %509 = vmatpush1.bf16.msra.mxu0 %v378
    %510 = vmatprep.subr.bf16.mxu0 0
    %511 = vmatpush1.bf16.msra.mxu0 %v379
    %512 = vmatprep.subr.bf16.mxu0 0
    %513 = vmatpush1.bf16.msra.mxu0 %v380
    %514 = vmatprep.subr.bf16.mxu0 0
    %515 = vmatpush1.bf16.msra.mxu0 %v381
    %516 = vmatprep.subr.bf16.mxu0 0
    %517 = vmatpush1.bf16.msra.mxu0 %v382
    %518 = vmatprep.subr.bf16.mxu0 0
    %519 = vmatpush1.bf16.msra.mxu0 %v383
    %520 = vmatprep.subr.bf16.mxu0 0
    %521 = vmatpush1.bf16.msra.mxu0 %v384
    %522 = vmatprep.mubr.bf16.mxu0 %v55
    %523 = vmatmul.mubr.bf16.gmra.mrb[0].mxu0 %v54
    %v524 = vpop.f32.mrb[0].mxu0
    %v525 = vadd.f32 %v484, %v524
    %v526 = vpop.f32.mrb[0].mxu0
    %v527 = vpop.f32.mrb[0].mxu0
    %v528 = vadd.f32 %v487, %v527
    %v529 = vpop.f32.mrb[0].mxu0
    %530 = vdwg.mxu0
    %531 = vmatprep.subr.bf16.mxu0 0
    %532 = vmatpush1.bf16.msra.mxu0 %v385
    %533 = vmatprep.subr.bf16.mxu0 0
    %534 = vmatpush1.bf16.msra.mxu0 %v386
    %535 = vmatprep.subr.bf16.mxu0 0
    %536 = vmatpush1.bf16.msra.mxu0 %v387
    %537 = vmatprep.subr.bf16.mxu0 0
    %538 = vmatpush1.bf16.msra.mxu0 %v388
    %539 = vmatprep.subr.bf16.mxu0 0
    %540 = vmatpush1.bf16.msra.mxu0 %v389
    %541 = vmatprep.subr.bf16.mxu0 0
    %542 = vmatpush1.bf16.msra.mxu0 %v390
    %543 = vmatprep.subr.bf16.mxu0 0
    %544 = vmatpush1.bf16.msra.mxu0 %v391
    %545 = vmatprep.subr.bf16.mxu0 0
    %546 = vmatpush1.bf16.msra.mxu0 %v392
    %547 = vmatprep.subr.bf16.mxu0 0
    %548 = vmatpush1.bf16.msra.mxu0 %v393
    %549 = vmatprep.subr.bf16.mxu0 0
    %550 = vmatpush1.bf16.msra.mxu0 %v394
    %551 = vmatprep.subr.bf16.mxu0 0
    %552 = vmatpush1.bf16.msra.mxu0 %v395
    %553 = vmatprep.subr.bf16.mxu0 0
    %554 = vmatpush1.bf16.msra.mxu0 %v396
    %555 = vmatprep.subr.bf16.mxu0 0
    %556 = vmatpush1.bf16.msra.mxu0 %v397
    %557 = vmatprep.subr.bf16.mxu0 0
    %558 = vmatpush1.bf16.msra.mxu0 %v398
    %559 = vmatprep.subr.bf16.mxu0 0
    %560 = vmatpush1.bf16.msra.mxu0 %v399
    %561 = vmatprep.subr.bf16.mxu0 0
    %562 = vmatpush1.bf16.msra.mxu0 %v400
    %563 = vmatprep.mubr.bf16.mxu0 %v57
    %564 = vmatmul.mubr.bf16.gmra.mrb[0].mxu0 %v56
    %v565 = vpop.f32.mrb[0].mxu0
    %v566 = vadd.f32 %v525, %v565
    %v567 = vpop.f32.mrb[0].mxu0
    %v568 = vpop.f32.mrb[0].mxu0
    %v569 = vadd.f32 %v528, %v568
    %v570 = vpop.f32.mrb[0].mxu0
    %571 = vdwg.mxu0
    %v572 = vmax.f32 %v566, 0.0
    %v573 = vmax.f32 %v569, 0.0
    %v574 = vpack.c.bf16 %v573, %v572
    %v575 = vld [vmem:[%s3] sm:$0xf]
    %v576 = vld [vmem:[%s3 + $0x4] sm:$0xf]
    %v577 = vld [vmem:[%s3 + $0x8] sm:$0xf]
    %v578 = vld [vmem:[%s3 + $0xc] sm:$0xf]
    %v579 = vld [vmem:[%s4] sm:$0x1]
    %v581 = vlaneseq
    %v582 = vshrl.u32 %v581, 7
    %v583 = vsub.s32 0, %v582
    %v584 = vrot.slane %v579, %v583
    %v590 = vunpack.c.l.b16 %v575
    %v591 = vunpack.c.l.b16 %v576
    %v592 = vunpack.c.l.b16 %v577
    %v593 = vunpack.c.l.b16 %v578
    %v594 = vpack.c.b16 %v591, %v590
    %v595 = vpack.c.b16 %v593, %v592
    %vm598 = vcmask 261120
    %v600 = vsel %vm598, %v574, 0
    %602 = vmatprep.subr.bf16.mxu0 0
    %603 = vmatpush1.bf16.msra.mxu0 %v594
    %604 = vmatprep.subr.bf16.mxu0 0
    %605 = vmatpush1.bf16.msra.mxu0 %v595
    %606 = vmatprep.subr.bf16.mxu0 0
    %607 = vmatpush1.bf16.msra.mxu0 0
    %608 = vmatprep.subr.bf16.mxu0 0
    %609 = vmatpush1.bf16.msra.mxu0 0
    %610 = vmatprep.subr.bf16.mxu0 0
    %611 = vmatpush1.bf16.msra.mxu0 0
    %612 = vmatprep.subr.bf16.mxu0 0
    %613 = vmatpush1.bf16.msra.mxu0 0
    %614 = vmatprep.subr.bf16.mxu0 0
    %615 = vmatpush1.bf16.msra.mxu0 0
    %616 = vmatprep.subr.bf16.mxu0 0
    %617 = vmatpush1.bf16.msra.mxu0 0
    %618 = vmatprep.subr.bf16.mxu0 0
    %619 = vmatpush1.bf16.msra.mxu0 0
    %620 = vmatprep.subr.bf16.mxu0 0
    %621 = vmatpush1.bf16.msra.mxu0 0
    %622 = vmatprep.subr.bf16.mxu0 0
    %623 = vmatpush1.bf16.msra.mxu0 0
    %624 = vmatprep.subr.bf16.mxu0 0
    %625 = vmatpush1.bf16.msra.mxu0 0
    %626 = vmatprep.subr.bf16.mxu0 0
    %627 = vmatpush1.bf16.msra.mxu0 0
    %628 = vmatprep.subr.bf16.mxu0 0
    %629 = vmatpush1.bf16.msra.mxu0 0
    %630 = vmatprep.subr.bf16.mxu0 0
    %631 = vmatpush1.bf16.msra.mxu0 0
    %632 = vmatprep.subr.bf16.mxu0 0
    %633 = vmatpush1.bf16.msra.mxu0 0
    %634 = vmatprep.mubr.bf16.mxu0 0
    %635 = vmatmul.mubr.bf16.gmra.mrb[0].mxu0 %v600
    %v636 = vpop.f32.mrb[0].mxu0
    %v637 = vadd.f32 %v584, %v636
    %v638 = vpop.f32.mrb[0].mxu0
    %v639 = vpop.f32.mrb[0].mxu0
    %v640 = vadd.f32 %v584, %v639
    %v641 = vpop.f32.mrb[0].mxu0
    %642 = vdwg.mxu0
    %v643 = vmax.f32 %v637, 0.0
    %v644 = vmax.f32 %v640, 0.0
    %v645 = vpack.c.bf16 %v644, %v643
    %v646 = vld [vmem:[%s5] sm:$0xf]
    %v647 = vld [vmem:[%s5 + $0x4] sm:$0xf]
    %v648 = vld [vmem:[%s6] sm:$0x1]
    %v650 = vlaneseq
    %v651 = vshrl.u32 %v650, 7
    %v652 = vsub.s32 0, %v651
    %v653 = vrot.slane %v648, %v652
    %v657 = vunpack.c.l.b16 %v646
    %v658 = vunpack.c.l.b16 %v647
    %v659 = vpack.c.b16 %v658, %v657
    %vm661 = vcmask 130048
    %v663 = vsel %vm661, %v645, 0
    %665 = vmatprep.subr.bf16.mxu0 0
    %666 = vmatpush1.bf16.msra.mxu0 %v659
    %667 = vmatprep.subr.bf16.mxu0 0
    %668 = vmatpush1.bf16.msra.mxu0 0
    %669 = vmatprep.subr.bf16.mxu0 0
    %670 = vmatpush1.bf16.msra.mxu0 0
    %671 = vmatprep.subr.bf16.mxu0 0
    %672 = vmatpush1.bf16.msra.mxu0 0
    %673 = vmatprep.subr.bf16.mxu0 0
    %674 = vmatpush1.bf16.msra.mxu0 0
    %675 = vmatprep.subr.bf16.mxu0 0
    %676 = vmatpush1.bf16.msra.mxu0 0
    %677 = vmatprep.subr.bf16.mxu0 0
    %678 = vmatpush1.bf16.msra.mxu0 0
    %679 = vmatprep.subr.bf16.mxu0 0
    %680 = vmatpush1.bf16.msra.mxu0 0
    %681 = vmatprep.subr.bf16.mxu0 0
    %682 = vmatpush1.bf16.msra.mxu0 0
    %683 = vmatprep.subr.bf16.mxu0 0
    %684 = vmatpush1.bf16.msra.mxu0 0
    %685 = vmatprep.subr.bf16.mxu0 0
    %686 = vmatpush1.bf16.msra.mxu0 0
    %687 = vmatprep.subr.bf16.mxu0 0
    %688 = vmatpush1.bf16.msra.mxu0 0
    %689 = vmatprep.subr.bf16.mxu0 0
    %690 = vmatpush1.bf16.msra.mxu0 0
    %691 = vmatprep.subr.bf16.mxu0 0
    %692 = vmatpush1.bf16.msra.mxu0 0
    %693 = vmatprep.subr.bf16.mxu0 0
    %694 = vmatpush1.bf16.msra.mxu0 0
    %695 = vmatprep.subr.bf16.mxu0 0
    %696 = vmatpush1.bf16.msra.mxu0 0
    %697 = vmatprep.mubr.bf16.mxu0 0
    %698 = vmatmul.mubr.bf16.gmra.mrb[0].mxu0 %v663
    %v699 = vpop.f32.mrb[0].mxu0
    %v700 = vadd.f32 %v653, %v699
    %v701 = vpop.f32.mrb[0].mxu0
    %v702 = vpop.f32.mrb[0].mxu0
    %v703 = vadd.f32 %v653, %v702
    %v704 = vpop.f32.mrb[0].mxu0
    %705 = vdwg.mxu0
    %v706 = vmax.f32 %v700, 0.0
    %v707 = vmax.f32 %v703, 0.0
    %v708 = vpack.c.bf16 %v707, %v706
    %v709 = vld [vmem:[%s7] sm:$0xf]
    %v710 = vld [vmem:[%s8] sm:$0x1]
    %v712 = vlaneseq
    %v713 = vshrl.u32 %v712, 7
    %v714 = vsub.s32 0, %v713
    %v715 = vrot.slane %v710, %v714
    %vm717 = vcmask 64512
    %v719 = vsel %vm717, %v708, 0
    %vm721 = vcmask 1043456
    %v723 = vsel %vm721, %v709, 0
    %725 = vmatprep.subr.bf16.mxu0 0
    %726 = vmatpush1.bf16.msra.mxu0 %v723
    %727 = vmatprep.subr.bf16.mxu0 0
    %728 = vmatpush1.bf16.msra.mxu0 0
    %729 = vmatprep.subr.bf16.mxu0 0
    %730 = vmatpush1.bf16.msra.mxu0 0
    %731 = vmatprep.subr.bf16.mxu0 0
    %732 = vmatpush1.bf16.msra.mxu0 0
    %733 = vmatprep.subr.bf16.mxu0 0
    %734 = vmatpush1.bf16.msra.mxu0 0
    %735 = vmatprep.subr.bf16.mxu0 0
    %736 = vmatpush1.bf16.msra.mxu0 0
    %737 = vmatprep.subr.bf16.mxu0 0
    %738 = vmatpush1.bf16.msra.mxu0 0
    %739 = vmatprep.subr.bf16.mxu0 0
    %740 = vmatpush1.bf16.msra.mxu0 0
    %741 = vmatprep.subr.bf16.mxu0 0
    %742 = vmatpush1.bf16.msra.mxu0 0
    %743 = vmatprep.subr.bf16.mxu0 0
    %744 = vmatpush1.bf16.msra.mxu0 0
    %745 = vmatprep.subr.bf16.mxu0 0
    %746 = vmatpush1.bf16.msra.mxu0 0
    %747 = vmatprep.subr.bf16.mxu0 0
    %748 = vmatpush1.bf16.msra.mxu0 0
    %749 = vmatprep.subr.bf16.mxu0 0
    %750 = vmatpush1.bf16.msra.mxu0 0
    %751 = vmatprep.subr.bf16.mxu0 0
    %752 = vmatpush1.bf16.msra.mxu0 0
    %753 = vmatprep.subr.bf16.mxu0 0
    %754 = vmatpush1.bf16.msra.mxu0 0
    %755 = vmatprep.subr.bf16.mxu0 0
    %756 = vmatpush1.bf16.msra.mxu0 0
    %757 = vmatprep.mubr.bf16.mxu0 0
    %758 = vmatmul.mubr.bf16.gmra.mrb[0].mxu0 %v719
    %v759 = vpop.f32.mrb[0].mxu0
    %v760 = vadd.f32 %v715, %v759
    %v761 = vpop.f32.mrb[0].mxu0
    %v762 = vpop.f32.mrb[0].mxu0
    %v763 = vadd.f32 %v715, %v762
    %v764 = vpop.f32.mrb[0].mxu0
    %765 = vdwg.mxu0
    %v766 = vmax.f32 %v760, 0.0
    %v767 = vmax.f32 %v763, 0.0
    %v768 = vpack.c.bf16 %v767, %v766
    %v769 = vld [vmem:[%s9] sm:$0xf]
    %v770 = vld [vmem:[%s10] sm:$0x1]
    %v772 = vlaneseq
    %v773 = vshrl.u32 %v772, 7
    %v774 = vsub.s32 0, %v773
    %v775 = vrot.slane %v770, %v774
    %v778 = vsel %vm717, %v768, 0
    %v781 = vsel %vm721, %v769, 0
    %783 = vmatprep.subr.bf16.mxu0 0
    %784 = vmatpush1.bf16.msra.mxu0 %v781
    %785 = vmatprep.subr.bf16.mxu0 0
    %786 = vmatpush1.bf16.msra.mxu0 0
    %787 = vmatprep.subr.bf16.mxu0 0
    %788 = vmatpush1.bf16.msra.mxu0 0
    %789 = vmatprep.subr.bf16.mxu0 0
    %790 = vmatpush1.bf16.msra.mxu0 0
    %791 = vmatprep.subr.bf16.mxu0 0
    %792 = vmatpush1.bf16.msra.mxu0 0
    %793 = vmatprep.subr.bf16.mxu0 0
    %794 = vmatpush1.bf16.msra.mxu0 0
    %795 = vmatprep.subr.bf16.mxu0 0
    %796 = vmatpush1.bf16.msra.mxu0 0
    %797 = vmatprep.subr.bf16.mxu0 0
    %798 = vmatpush1.bf16.msra.mxu0 0
    %799 = vmatprep.subr.bf16.mxu0 0
    %800 = vmatpush1.bf16.msra.mxu0 0
    %801 = vmatprep.subr.bf16.mxu0 0
    %802 = vmatpush1.bf16.msra.mxu0 0
    %803 = vmatprep.subr.bf16.mxu0 0
    %804 = vmatpush1.bf16.msra.mxu0 0
    %805 = vmatprep.subr.bf16.mxu0 0
    %806 = vmatpush1.bf16.msra.mxu0 0
    %807 = vmatprep.subr.bf16.mxu0 0
    %808 = vmatpush1.bf16.msra.mxu0 0
    %809 = vmatprep.subr.bf16.mxu0 0
    %810 = vmatpush1.bf16.msra.mxu0 0
    %811 = vmatprep.subr.bf16.mxu0 0
    %812 = vmatpush1.bf16.msra.mxu0 0
    %813 = vmatprep.subr.bf16.mxu0 0
    %814 = vmatpush1.bf16.msra.mxu0 0
    %815 = vmatprep.mubr.bf16.mxu0 0
    %816 = vmatmul.mubr.bf16.gmra.mrb[0].mxu0 %v778
    %v817 = vpop.f32.mrb[0].mxu0
    %v818 = vadd.f32 %v775, %v817
    %v819 = vpop.f32.mrb[0].mxu0
    %v820 = vpop.f32.mrb[0].mxu0
    %v821 = vadd.f32 %v775, %v820
    %v822 = vpop.f32.mrb[0].mxu0
    %823 = vdwg.mxu0
    %824 = vst.msk [vmem:[#allocation2] sm:$0xff] %vm717, %v818
    %825 = vst.msk [vmem:[#allocation2 + $0x8] sm:$0xff] %vm717, %v821
    // Predicated region
    $region46: #{tpu_custom_call.1} parent=1 // pred_check
      _
    $region47: #{tpu_custom_call.1} parent=1 // pred_check_branch
      %827 = sbr.rel (0) target = $region49
    $region48: #{tpu_custom_call.1} parent=1 // pred_region
      %s829 = ssub.s32 256, 128
      %830 = vsyncadd [#allocation3], %s829
      %s831 = sshll.u32 [#allocation2], 4
      %s832 = int_to_ptr.vmem [resolvable:$true] %s831
      %837 = dma.vmem_to_hbm [thread:$0]  %s832, 128, %s11, [#allocation3], 128, 128, 8
    $region49: #{tpu_custom_call.1} parent=1 // pred_fallthru
      _
    // Predicated region
    $region50: #{tpu_custom_call.1} parent=1 // pred_check
      _
    $region51: #{tpu_custom_call.1} parent=1 // pred_check_branch
      %839 = sbr.rel (0) target = $region53
    $region52: #{tpu_custom_call.1} parent=1 // pred_region
      %840 = dma.done [#allocation3], 256
    $region53: #{tpu_custom_call.1} parent=1 // pred_fallthru
      _
    %841 = vsyncpa [#allocation3], 1

</llo_original>
